<compile_context>
chip_gen: v5e
topology: v5e:2x2
jax: 0.10.0
libtpu: 0.0.40
codegen_flags: <defaults>
</compile_context>

<pallas_src>
import functools

import jax
import jax.numpy as jnp
from jax.experimental import pallas as pl
from jax.experimental.pallas import tpu as pltpu

_MIB = 1024 * 1024


def _cdiv(a, b):
    return (a + b - 1) // b


def _round_up(x, m):
    return ((x + m - 1) // m) * m


def _vmem_limit_bytes():
    """Scoped-VMEM budget derived from the part's physical VMEM."""
    cap = None
    try:
        cap = getattr(pltpu.get_tpu_info(), "vmem_capacity_bytes", None)
    except Exception:
        cap = None
    if not cap:
        kind = ""
        try:
            kind = jax.devices()[0].device_kind.lower()
        except Exception:
            pass
        cap = (64 if "v7" in kind else 128) * _MIB
    if cap <= 64 * _MIB:       # v7x-class: 64 MiB per TensorCore
        return 48 * _MIB
    return 64 * _MIB           # v5e / v6e: 128 MiB


def _linear_ws_kernel(x_ref, w_ref, b_ref, o_ref):
    # Weight-stationary: whole (K, N) weight resident in VMEM; single dot with
    # the bias fused.  x_ref: (tm, K), w_ref: (K, N), b_ref: (1, N) f32.
    o_ref[...] = (jnp.dot(x_ref[...], w_ref[...],
                          preferred_element_type=jnp.float32)
                  + b_ref[...]).astype(o_ref.dtype)


def _linear_reduce_kernel(nk, x_ref, w_ref, b_ref, o_ref, acc_ref):
    # Generic tiled matmul with a trailing K reduction axis.  `nk` is the
    # static number of k steps.  The last step fuses the epilogue so the
    # accumulator is not stored and re-read on the final step.
    partial = jnp.dot(x_ref[...], w_ref[...], preferred_element_type=jnp.float32)
    if nk == 1:
        o_ref[...] = (partial + b_ref[...]).astype(o_ref.dtype)
        return

    k = pl.program_id(2)

    @pl.when(k == 0)
    def _():
        acc_ref[...] = partial

    @pl.when(jnp.logical_and(k > 0, k < nk - 1))
    def _():
        acc_ref[...] += partial

    @pl.when(k == nk - 1)
    def _():
        o_ref[...] = (acc_ref[...] + partial + b_ref[...]).astype(o_ref.dtype)


def _linear_pallas(x2d, w, b, *, operand_dtype=None, force_reduction=False,
                   tm=None, tn=None, tk=None):
    """y = x2d @ w + b. x2d: (M, F_in), w: (F_in, F_out), b: (F_out,)."""
    M, K = x2d.shape
    Kw, N = w.shape
    assert Kw == K, (Kw, K)
    out_dtype = x2d.dtype

    if operand_dtype is not None:      # opt-in bf16 MXU operands (f32 accumulate)
        x2d = x2d.astype(operand_dtype)
        w = w.astype(operand_dtype)
    isz = jnp.dtype(x2d.dtype).itemsize
    osz = jnp.dtype(out_dtype).itemsize
    b_f32 = b.astype(jnp.float32).reshape(1, N)

    vmem_limit = _vmem_limit_bytes()
    w_bytes = K * N * isz
    # Weight-stationary if the (double-buffered) resident weight leaves at
    # least 16 MiB for the streaming x / y tiles.
    use_ws = (not force_reduction) and (2 * w_bytes + 16 * _MIB <= vmem_limit)

    if use_ws:
        tm_ = min(tm or 512, _round_up(M, 8))
        # Feed both TensorCores (v7x) when there is enough work to split.
        if M > 8 and _cdiv(M, tm_) < 2:
            tm_ = max(8, _round_up(_cdiv(M, 2), 8))
        # Shrink the row tile until resident weight + x/y double-buffers fit.
        while tm_ > 8 and (2 * w_bytes + 2 * tm_ * (K * isz + N * osz)
                           + 8 * N + _MIB) > vmem_limit:
            tm_ = max(8, tm_ // 2)

        grid = (_cdiv(M, tm_),)
        cost = pl.CostEstimate(
            flops=2 * M * K * N, transcendentals=0,
            bytes_accessed=M * K * isz + K * N * isz + M * N * osz + N * 4)

        return pl.pallas_call(
            _linear_ws_kernel,
            out_shape=jax.ShapeDtypeStruct((M, N), out_dtype),
            grid_spec=pltpu.PrefetchScalarGridSpec(
                num_scalar_prefetch=0,
                grid=grid,
                in_specs=[
                    pl.BlockSpec((tm_, K), lambda i: (i, 0)),
                    pl.BlockSpec((K, N), lambda i: (0, 0)),   # resident weight
                    pl.BlockSpec((1, N), lambda i: (0, 0)),   # resident bias
                ],
                out_specs=pl.BlockSpec((tm_, N), lambda i: (i, 0)),
            ),
            compiler_params=pltpu.CompilerParams(
                dimension_semantics=("parallel",),
                vmem_limit_bytes=vmem_limit,
            ),
            cost_estimate=cost,
        )(x2d, w, b_f32)

    # ---- generic K-reduction path (weight too large to keep resident) ----
    tm_ = min(tm or 512, _round_up(M, 8))
    tn_ = min(tn or 512, _round_up(N, 128))
    tk_ = min(tk or 2048, _round_up(K, 128))
    if tk_ >= K:
        tk_ = K                       # single reduction step, no K padding
    if M > 8 and _cdiv(M, tm_) * _cdiv(N, tn_) < 2:
        tm_ = max(8, _round_up(_cdiv(M, 2), 8))

    K_pad = _round_up(K, tk_)
    x_in, w_in = x2d, w
    if K_pad != K:
        # Zero-padding the reduction axis is exact; ragged M / N edge tiles are
        # handled by Pallas' masked edge blocks (no padding, no output slice).
        x_in = jnp.pad(x2d, ((0, 0), (0, K_pad - K)))
        w_in = jnp.pad(w, ((0, K_pad - K), (0, 0)))

    n_i, n_j, n_k = _cdiv(M, tm_), _cdiv(N, tn_), K_pad // tk_
    cost = pl.CostEstimate(
        flops=2 * M * K_pad * N, transcendentals=0,
        bytes_accessed=(n_j * M * K_pad * isz + n_i * K_pad * N * isz
                        + M * N * osz + n_i * N * 4))

    kernel = functools.partial(_linear_reduce_kernel, n_k)
    return pl.pallas_call(
        kernel,
        out_shape=jax.ShapeDtypeStruct((M, N), out_dtype),
        grid_spec=pltpu.PrefetchScalarGridSpec(
            num_scalar_prefetch=0,
            grid=(n_i, n_j, n_k),
            in_specs=[
                pl.BlockSpec((tm_, tk_), lambda i, j, k: (i, k)),
                pl.BlockSpec((tk_, tn_), lambda i, j, k: (k, j)),
                pl.BlockSpec((1, tn_), lambda i, j, k: (0, j)),
            ],
            out_specs=pl.BlockSpec((tm_, tn_), lambda i, j, k: (i, j)),
            scratch_shapes=[pltpu.VMEM((tm_, tn_), jnp.float32)],
        ),
        compiler_params=pltpu.CompilerParams(
            dimension_semantics=("parallel", "parallel", "arbitrary"),
            vmem_limit_bytes=vmem_limit,
        ),
        cost_estimate=cost,
    )(x_in, w_in, b_f32)


def time_distributed_linear(x, w, b, *, batch_first=True, operand_dtype=None):
    """Pallas TimeDistributed(Linear) forward.

    x: (..., F_in); ndim <= 2 -> direct Linear; ndim >= 3 -> flatten leading
       dims, apply Linear, reshape back (matches the PyTorch module).
    w: (F_in, F_out)  (transpose of torch's Linear.weight)
    b: (F_out,)
    """
    if x.ndim <= 2:
        x2d = x if x.ndim == 2 else x.reshape(1, -1)
        y = _linear_pallas(x2d, w, b, operand_dtype=operand_dtype)
        return y if x.ndim == 2 else y.reshape(-1)

    F_in = x.shape[-1]
    x_flat = x.reshape(-1, F_in)                 # x.contiguous().view(-1, x.size(-1))
    y_flat = _linear_pallas(x_flat, w, b, operand_dtype=operand_dtype)
    F_out = y_flat.shape[-1]
    if batch_first:
        return y_flat.reshape(x.shape[0], -1, F_out)   # (B, -1, F_out)
    return y_flat.reshape(-1, x.shape[1], F_out)       # (-1, x.size(1), F_out)


if __name__ == "__main__":
    key = jax.random.PRNGKey(0)
    k_x, k_w, k_b = jax.random.split(key, 3)

    B, T, F_in, F_out = 2, 8, 32, 32
    x = jax.random.normal(k_x, (B, T, F_in), dtype=jnp.float32)
    w = jax.random.normal(k_w, (F_in, F_out), dtype=jnp.float32) * 0.05
    b = jax.random.normal(k_b, (F_out,), dtype=jnp.float32) * 0.05

    # 3-D path (the TimeDistributed hot path, batch_first=True).
    y = jax.block_until_ready(time_distributed_linear(x, w, b, batch_first=True))
    y_ref = (x.reshape(-1, F_in) @ w + b).reshape(B, T, F_out)
    assert y.shape == (B, T, F_out), y.shape
    assert jnp.allclose(y, y_ref, atol=1e-5, rtol=1e-5)

    # batch_first=False reshape semantics (same data, torch-style view).
    y_nb = jax.block_until_ready(time_distributed_linear(x, w, b, batch_first=False))
    assert jnp.allclose(y_nb.reshape(-1, F_out), y_ref.reshape(-1, F_out),
                        atol=1e-5, rtol=1e-5)

    # 2-D fast path.
    x2 = jax.random.normal(k_x, (B * T, F_in), dtype=jnp.float32)
    y2 = jax.block_until_ready(time_distributed_linear(x2, w, b))
    assert jnp.allclose(y2, x2 @ w + b, atol=1e-5, rtol=1e-5)

    # 1-D fast path.
    x1 = jax.random.normal(k_x, (F_in,), dtype=jnp.float32)
    y1 = jax.block_until_ready(time_distributed_linear(x1, w, b))
    assert y1.shape == (F_out,)
    assert jnp.allclose(y1, x1 @ w + b, atol=1e-5, rtol=1e-5)

    # Ragged shapes: B*T, F_in, F_out not multiples of any tile (masked edges).
    Br, Tr, Fi_r, Fo_r = 3, 5, 20, 17
    xr = jax.random.normal(k_x, (Br, Tr, Fi_r), dtype=jnp.float32)
    wr = jax.random.normal(k_w, (Fi_r, Fo_r), dtype=jnp.float32) * 0.05
    br = jax.random.normal(k_b, (Fo_r,), dtype=jnp.float32) * 0.05
    yr = jax.block_until_ready(time_distributed_linear(xr, wr, br))
    yr_ref = (xr.reshape(-1, Fi_r) @ wr + br).reshape(Br, Tr, Fo_r)
    assert jnp.allclose(yr, yr_ref, atol=1e-5, rtol=1e-5)

    # Force the generic K-reduction path (multi-step accumulate + fused epilogue,
    # ragged N edge tiles).
    Mg, Kg, Ng = 24, 256, 144
    xg = jax.random.normal(k_x, (Mg, Kg), dtype=jnp.float32)
    wg = jax.random.normal(k_w, (Kg, Ng), dtype=jnp.float32) * 0.05
    bg = jax.random.normal(k_b, (Ng,), dtype=jnp.float32) * 0.05
    yg = jax.block_until_ready(_linear_pallas(xg, wg, bg, force_reduction=True,
                                              tm=16, tn=128, tk=128))
    assert jnp.allclose(yg, xg @ wg + bg, atol=1e-4, rtol=1e-4)

    # Opt-in bf16 operands (f32 accumulation) smoke test.
    yb = jax.block_until_ready(
        time_distributed_linear(x, w, b, operand_dtype=jnp.bfloat16))
    assert yb.dtype == x.dtype
    assert jnp.allclose(yb, y_ref, atol=5e-2, rtol=0)

    print("KERNEL_OK")
</pallas_src>

<mosaic_0001>
module attributes {stable_mosaic.version = 11 : i64} {
  func.func @_linear_ws_kernel(%arg0: i32, %arg1: memref<8x32xf32, #tpu.memory_space<vmem>>, %arg2: memref<32x32xf32, #tpu.memory_space<vmem>>, %arg3: memref<1x32xf32, #tpu.memory_space<vmem>>, %arg4: memref<8x32xf32, #tpu.memory_space<vmem>>) attributes {dimension_semantics = [#tpu.dimension_semantics<parallel>], iteration_bounds = array<i64: 2>, scalar_prefetch = 0 : i64, scratch_operands = 0 : i64, tpu.core_type = #tpu.core_type<tc>, window_params = [{transform_indices = @transform_0, window_bounds = array<i64: 8, 32>}, {pipeline_mode = #tpu.pipeline_mode<synchronous>, transform_indices = @transform_1, window_bounds = array<i64: 32, 32>}, {pipeline_mode = #tpu.pipeline_mode<synchronous>, transform_indices = @transform_2, window_bounds = array<i64: 1, 32>}, {transform_indices = @transform_3, window_bounds = array<i64: 8, 32>}]} {
    %c0 = arith.constant 0 : index
    %c0_0 = arith.constant 0 : index
    %0 = vector.load %arg1[%c0, %c0_0] : memref<8x32xf32, #tpu.memory_space<vmem>>, vector<8x32xf32>
    %c0_1 = arith.constant 0 : index
    %c0_2 = arith.constant 0 : index
    %1 = vector.load %arg2[%c0_1, %c0_2] : memref<32x32xf32, #tpu.memory_space<vmem>>, vector<32x32xf32>
    %cst = arith.constant dense<0.000000e+00> : vector<8x32xf32>
    %2 = tpu.matmul %0, %1, %cst {dimension_numbers = #tpu.dot_dimension_numbers<[1], [0], [0], [1], [0, 0, 1, 1], [], []>} : vector<8x32xf32>, vector<32x32xf32>, vector<8x32xf32> -> vector<8x32xf32>
    %c0_3 = arith.constant 0 : index
    %c0_4 = arith.constant 0 : index
    %3 = vector.load %arg3[%c0_3, %c0_4] : memref<1x32xf32, #tpu.memory_space<vmem>>, vector<1x32xf32>
    %4 = vector.broadcast %3 : vector<1x32xf32> to vector<8x32xf32>
    %5 = arith.addf %2, %4 : vector<8x32xf32>
    %c0_5 = arith.constant 0 : index
    %c0_6 = arith.constant 0 : index
    %6 = vector.load %arg4[%c0_5, %c0_6] : memref<8x32xf32, #tpu.memory_space<vmem>>, vector<8x32xf32>
    tpu.vector_store %arg4[%c0_5, %c0_6], %5 {strides = array<i32>} : memref<8x32xf32, #tpu.memory_space<vmem>>, vector<8x32xf32>,
    return
  }
  func.func @transform_0(%arg0: i32) -> (i32, i32) {
    %c0_i32 = arith.constant 0 : i32
    %c0_i32_0 = arith.constant 0 : i32
    return %arg0, %c0_i32 : i32, i32
  }
  func.func @transform_1(%arg0: i32) -> (i32, i32) {
    %c0_i32 = arith.constant 0 : i32
    %c0_i32_0 = arith.constant 0 : i32
    %c0_i32_1 = arith.constant 0 : i32
    return %c0_i32, %c0_i32_0 : i32, i32
  }
  func.func @transform_2(%arg0: i32) -> (i32, i32) {
    %c0_i32 = arith.constant 0 : i32
    %c0_i32_0 = arith.constant 0 : i32
    %c0_i32_1 = arith.constant 0 : i32
    return %c0_i32, %c0_i32_0 : i32, i32
  }
  func.func @transform_3(%arg0: i32) -> (i32, i32) {
    %c0_i32 = arith.constant 0 : i32
    %c0_i32_0 = arith.constant 0 : i32
    return %arg0, %c0_i32 : i32, i32
  }
}

</mosaic_0001>

<llo_original>
// kernel: tpu_custom_call.1
$region0: #{tpu_custom_call.1}
  #allocation0 [shape = 'u32[]', space=smem, size = 0x4, offset = 0x4, fixed_abs, tag = 'smem constant byte address 0x4 - core index']
  #allocation1 [shape = 'u32[72,128]{1,0:T(1,128)}', space=vmem, size = 0x9000, scoped, tag = 'internal scratch']
  %s0 = inlined_call_operand.hbm [shape: f32[16,32], index: 0, kind: input, shape index: {}]
  %s1 = inlined_call_operand.hbm [shape: f32[32,32], index: 1, kind: input, shape index: {}]
  %s2 = inlined_call_operand.vmem [shape: f32[1,32], index: 2, kind: input, shape index: {}]
  %s3 = inlined_call_operand.hbm [shape: f32[16,32], index: 3, kind: output, shape index: {}]
  %s4 = sld [smem:[#allocation0]]
  $region53: #{tpu_custom_call.1} parent=0
    _
  %s6 = ssub.s32 1, %s4
  %s7 = scalar_select 0, %s6, %s4
  $region1: #{tpu_custom_call.1} parent=0
    #allocation2 [shape = 'u8[8192]{0}', space=vmem, size = 0x2000, scoped, tag = 'input window, operand 0']
    #allocation3 [shape = 's32[2]{0}', space=sflag, size = 0x8, scoped, tag = 'scoped memory for tpu_custom_call.1']
    #allocation4 [shape = 's32[2]{0}', space=sflag, size = 0x8, scoped, tag = 'scoped memory for tpu_custom_call.1']
    #allocation5 [shape = 'u8[16384]{0}', space=vmem, size = 0x4000, scoped, tag = 'input window, operand 1, single buffered']
    #allocation6 [shape = 's32[1]{0}', space=sflag, size = 0x4, scoped, tag = 'scoped memory for tpu_custom_call.1']
    #allocation7 [shape = 'u8[8192]{0}', space=vmem, size = 0x2000, scoped, tag = 'output window, operand 0']
    %8 = vsyncpa [#allocation3], 0
    %s9 = scalar_lea.sflag [#allocation3], 1
    %10 = vsyncpa %s9, 0
    %11 = vsyncpa [#allocation6], 0
    %12 = vsyncpa [#allocation4], 0
    %s13 = scalar_lea.sflag [#allocation4], 1
    %14 = vsyncpa %s13, 0
    loop: start=0, step=1, limit=4
    $region2: #{tpu_custom_call.1} parent=1 // loop_pre_header
      _
    $region3: #{tpu_custom_call.1} parent=1 // loop_header
      %s16 = sphi 0, %s20
      %p17 = scmp.ge.s32.totalorder %s16, 4
      %s26 = sphi 0, %s28
      %s29 = sphi 0, %s26
      %s30 = sphi 0, %s29
      %s46 = sphi 0, %s30
      %s50 = sphi 0, %s50
      %s52 = sphi 0, %s50
      %s53 = sphi 0, %s52
      %s67 = sphi 0, %s53
      %s71 = sphi 0, %s71
      %s73 = sphi 0, %s71
      %s74 = sphi 0, %s73
      %s88 = sphi 0, %s74
      %s94 = sphi 0, %s96
      %s97 = sphi 0, %s94
      %s98 = sphi 0, %s97
      %s114 = sphi 0, %s98
    $region4: #{tpu_custom_call.1} parent=1 // loop_header_branch
      %19 = sbr.rel (%p17) target = $region8
    $region5: #{tpu_custom_call.1} parent=1 // loop_body
      %s21 = ssub.s32 %s16, 1
      %s22 = ssub.s32 %s16, 2
      %s23 = sadd.s32 %s16, 1
      %s24 = ssub.s32 %s16, %s23
      %p25 = scmp.eq.s32.totalorder %s24, 0
      %s27 = sadd.s32 %s26, 1
      %s28 = scalar_select %p25, %s26, %s27
      %p31 = pneg %p25
      %p32 = scmp.eq.s32.totalorder %s16, 1
      %p33 = por %p31, %p32
      %p34 = scmp.ne.s32.totalorder %s26, %s29
      %p35 = scmp.eq.s32.totalorder %s16, 0
      %p36 = por %p34, %p35
      %p37 = scmp.ne.s32.totalorder %s26, %s29
      %p38 = scmp.eq.s32.totalorder %s21, 1
      %p39 = por %p37, %p38
      %p40 = scmp.ne.s32.totalorder %s29, %s30
      %p41 = scmp.eq.s32.totalorder %s21, 0
      %p42 = por %p40, %p41
      %p43 = scmp.ne.s32.totalorder %s29, %s30
      %p44 = scmp.eq.s32.totalorder %s22, 1
      %p45 = por %p43, %p44
      %p47 = scmp.ne.s32.totalorder %s30, %s46
      %p48 = scmp.eq.s32.totalorder %s22, 0
      %p49 = por %p47, %p48
      %s51 = sadd.s32 %s50, 1
      %p54 = scmp.eq.s32.totalorder %s16, 1
      %p55 = scmp.ne.s32.totalorder %s50, %s52
      %p56 = scmp.eq.s32.totalorder %s16, 0
      %p57 = por %p55, %p56
      %p58 = scmp.ne.s32.totalorder %s50, %s52
      %p59 = scmp.eq.s32.totalorder %s21, 1
      %p60 = por %p58, %p59
      %p61 = scmp.ne.s32.totalorder %s52, %s53
      %p62 = scmp.eq.s32.totalorder %s21, 0
      %p63 = por %p61, %p62
      %p64 = scmp.ne.s32.totalorder %s52, %s53
      %p65 = scmp.eq.s32.totalorder %s22, 1
      %p66 = por %p64, %p65
      %p68 = scmp.ne.s32.totalorder %s53, %s67
      %p69 = scmp.eq.s32.totalorder %s22, 0
      %p70 = por %p68, %p69
      %s72 = sadd.s32 %s71, 1
      %p75 = scmp.eq.s32.totalorder %s16, 1
      %p76 = scmp.ne.s32.totalorder %s71, %s73
      %p77 = scmp.eq.s32.totalorder %s16, 0
      %p78 = por %p76, %p77
      %p79 = scmp.ne.s32.totalorder %s71, %s73
      %p80 = scmp.eq.s32.totalorder %s21, 1
      %p81 = por %p79, %p80
      %p82 = scmp.ne.s32.totalorder %s73, %s74
      %p83 = scmp.eq.s32.totalorder %s21, 0
      %p84 = por %p82, %p83
      %p85 = scmp.ne.s32.totalorder %s73, %s74
      %p86 = scmp.eq.s32.totalorder %s22, 1
      %p87 = por %p85, %p86
      %p89 = scmp.ne.s32.totalorder %s74, %s88
      %p90 = scmp.eq.s32.totalorder %s22, 0
      %p91 = por %p89, %p90
      %s92 = ssub.s32 %s16, %s23
      %p93 = scmp.eq.s32.totalorder %s92, 0
      %s95 = sadd.s32 %s94, 1
      %s96 = scalar_select %p93, %s94, %s95
      %p99 = pneg %p93
      %p100 = scmp.eq.s32.totalorder %s16, 1
      %p101 = por %p99, %p100
      %p102 = scmp.ne.s32.totalorder %s94, %s97
      %p103 = scmp.eq.s32.totalorder %s16, 0
      %p104 = por %p102, %p103
      %p105 = scmp.ne.s32.totalorder %s94, %s97
      %p106 = scmp.eq.s32.totalorder %s21, 1
      %p107 = por %p105, %p106
      %p108 = scmp.ne.s32.totalorder %s97, %s98
      %p109 = scmp.eq.s32.totalorder %s21, 0
      %p110 = por %p108, %p109
      %p111 = scmp.ne.s32.totalorder %s97, %s98
      %p112 = scmp.eq.s32.totalorder %s22, 1
      %p113 = por %p111, %p112
      %p115 = scmp.ne.s32.totalorder %s98, %s114
      %p116 = scmp.eq.s32.totalorder %s22, 0
      %p117 = por %p115, %p116
      %p118 = scmp.le.s32.totalorder 1, %s16
      %p119 = scmp.lt.s32.totalorder %s16, 3
      %p120 = pnand %p118, %p119
      %p121 = pneg %p120
      // Predicated region
      $region9: #{tpu_custom_call.1} parent=5 // pred_check
        _
      $region10: #{tpu_custom_call.1} parent=5 // pred_check_branch
        %123 = sbr.rel (%p120) target = $region12
      $region11: #{tpu_custom_call.1} parent=5 // pred_region
        %s124 = ssub.s32 %s16, 1
        // Predicated region
        $region13: #{tpu_custom_call.1} parent=11 // pred_check
          %p125 = pneg %p63
        $region14: #{tpu_custom_call.1} parent=11 // pred_check_branch
          %127 = sbr.rel (%p125) target = $region16
        $region15: #{tpu_custom_call.1} parent=11 // pred_region
          %129 = vsyncadd [#allocation6], 0
          %s130 = sshll.u32 %s1, 4
          %s131 = int_to_ptr.hbm [resolvable:$true] %s130
          %s132 = sshll.u32 [#allocation5], 4
          %s133 = int_to_ptr.vmem [resolvable:$true] %s132
          %138 = dma.hbm_to_vmem [thread:$0]  %s131, 512, %s133, [#allocation6], 128, 128, 8
        $region16: #{tpu_custom_call.1} parent=11 // pred_fallthru
          _
        // Predicated region
        $region17: #{tpu_custom_call.1} parent=11 // pred_check
          %p139 = pneg %p84
        $region18: #{tpu_custom_call.1} parent=11 // pred_check_branch
          %141 = sbr.rel (%p139) target = $region20
        $region19: #{tpu_custom_call.1} parent=11 // pred_region
          _
        $region20: #{tpu_custom_call.1} parent=11 // pred_fallthru
          _
      $region12: #{tpu_custom_call.1} parent=5 // pred_fallthru
        _
      %p142 = scmp.lt.s32.totalorder %s16, 2
      // Predicated region
      $region21: #{tpu_custom_call.1} parent=5 // pred_check
        %p143 = pneg %p142
      $region22: #{tpu_custom_call.1} parent=5 // pred_check_branch
        %145 = sbr.rel (%p143) target = $region24
      $region23: #{tpu_custom_call.1} parent=5 // pred_region
        // Predicated region
        $region25: #{tpu_custom_call.1} parent=23 // pred_check
          %p146 = pneg %p36
        $region26: #{tpu_custom_call.1} parent=23 // pred_check_branch
          %148 = sbr.rel (%p146) target = $region28
        $region27: #{tpu_custom_call.1} parent=23 // pred_region
          %s149 = sand.u32 %s26, 1
          %s150 = scalar_lea.sflag [#allocation3], %s149
          %s151 = sand.u32 %s26, 1
          %s152 = smul.addr %s151, 8
          %s153 = scalar_lea.vmem [#allocation2], %s152
          %155 = vsyncadd %s150, 0
          %s156 = smul.addr %s16, 8
          %s157 = scalar_lea.hbm %s0, %s156
          %s159 = sshll.u32 %s157, 4
          %s160 = int_to_ptr.hbm [resolvable:$true] %s159
          %s161 = sshll.u32 %s153, 4
          %s162 = int_to_ptr.vmem [resolvable:$true] %s161
          %164 = dma.hbm_to_vmem [thread:$0]  %s160, 128, %s162, %s150
        $region28: #{tpu_custom_call.1} parent=23 // pred_fallthru
          _
      $region24: #{tpu_custom_call.1} parent=5 // pred_fallthru
        _
      %p165 = scmp.le.s32.totalorder 1, %s16
      %p166 = scmp.lt.s32.totalorder %s16, 3
      %p167 = pnand %p165, %p166
      %p168 = pneg %p167
      // Predicated region
      $region29: #{tpu_custom_call.1} parent=5 // pred_check
        _
      $region30: #{tpu_custom_call.1} parent=5 // pred_check_branch
        %170 = sbr.rel (%p167) target = $region32
      $region31: #{tpu_custom_call.1} parent=5 // pred_region
        %s171 = ssub.s32 %s16, 1
        %s172 = sand.u32 %s29, 1
        %s173 = scalar_lea.sflag [#allocation3], %s172
        %s174 = sand.u32 %s29, 1
        %s175 = smul.addr %s174, 8
        %s176 = scalar_lea.vmem [#allocation2], %s175
        // Predicated region
        $region33: #{tpu_custom_call.1} parent=31 // pred_check
          %p177 = pneg %p42
        $region34: #{tpu_custom_call.1} parent=31 // pred_check_branch
          %179 = sbr.rel (%p177) target = $region36
        $region35: #{tpu_custom_call.1} parent=31 // pred_region
          %181 = dma.done %s173, 128
        $region36: #{tpu_custom_call.1} parent=31 // pred_fallthru
          _
        // Predicated region
        $region37: #{tpu_custom_call.1} parent=31 // pred_check
          %p182 = pneg %p63
        $region38: #{tpu_custom_call.1} parent=31 // pred_check_branch
          %184 = sbr.rel (%p182) target = $region40
        $region39: #{tpu_custom_call.1} parent=31 // pred_region
          %186 = dma.done [#allocation6], 512
        $region40: #{tpu_custom_call.1} parent=31 // pred_fallthru
          _
        %s187 = sand.u32 %s29, 1
        %s188 = scalar_lea.sflag [#allocation3], %s187
        %s189 = sand.u32 %s29, 1
        %s190 = smul.addr %s189, 8
        %s191 = scalar_lea.vmem [#allocation2], %s190
        %p192 = pneg %p42
        %p193 = pneg %p39
        %p194 = pneg %p63
        %p195 = pneg %p60
        %p196 = pneg %p84
        %p197 = pneg %p81
        %p198 = pneg %p110
        %p199 = pneg %p107
        %s200 = sand.u32 %s97, 1
        %s201 = scalar_lea.sflag [#allocation4], %s200
        %s202 = sand.u32 %s97, 1
        %s203 = smul.addr %s202, 8
        %s204 = scalar_lea.vmem [#allocation7], %s203
        %v205 = vld [vmem:[%s176] sm:$0xff]
        %v206 = vld [vmem:[#allocation5] sm:$0xff]
        %v207 = vld [vmem:[#allocation5 + $0x8] sm:$0xff]
        %v208 = vld [vmem:[#allocation5 + $0x10] sm:$0xff]
        %v209 = vld [vmem:[#allocation5 + $0x18] sm:$0xff]
        %v210 = vld [vmem:[%s2] sm:$0x1]
        %v212 = vperm.slane %v210, 0
        %vm214 = vcmask 261120
        %v216 = vsel %vm214, %v205, 0
        %218 = vmatpush.msra.mxu0 0.0
        %219 = vmatpush.msra.mxu0 0.0
        %220 = vmatpush.msra.mxu0 0.0
        %221 = vmatpush.msra.mxu0 0.0
        %222 = vmatpush.msra.mxu0 0.0
        %223 = vmatpush.msra.mxu0 0.0
        %224 = vmatpush.msra.mxu0 0.0
        %225 = vmatpush.msra.mxu0 0.0
        %226 = vmatpush.msra.mxu0 0.0
        %227 = vmatpush.msra.mxu0 0.0
        %228 = vmatpush.msra.mxu0 0.0
        %229 = vmatpush.msra.mxu0 0.0
        %230 = vmatpush.msra.mxu0 %v209
        %231 = vmatpush.msra.mxu0 %v208
        %232 = vmatpush.msra.mxu0 %v207
        %233 = vmatpush.msra.mxu0 %v206
        %234 = vmatmul.f32.gmra.mxu0 %v216
        %v235 = vpop.f32.mrf.mxu0
        %v236 = vadd.f32 %v212, %v235
        %237 = vdwg.mxu0
        %238 = vst.msk [vmem:[%s204] sm:$0xff] %vm214, %v236
        %s239 = sand.u32 %s97, 1
        %s240 = scalar_lea.sflag [#allocation4], %s239
        %s241 = sand.u32 %s97, 1
        %s242 = smul.addr %s241, 8
        %s243 = scalar_lea.vmem [#allocation7], %s242
        // Predicated region
        $region41: #{tpu_custom_call.1} parent=31 // pred_check
          %p244 = pneg %p107
        $region42: #{tpu_custom_call.1} parent=31 // pred_check_branch
          %246 = sbr.rel (%p244) target = $region44
        $region43: #{tpu_custom_call.1} parent=31 // pred_region
          %248 = vsyncadd %s240, 0
          %s249 = smul.addr %s21, 8
          %s250 = scalar_lea.hbm %s3, %s249
          %s252 = sshll.u32 %s243, 4
          %s253 = int_to_ptr.vmem [resolvable:$true] %s252
          %s254 = sshll.u32 %s250, 4
          %s255 = int_to_ptr.hbm [resolvable:$true] %s254
          %257 = dma.vmem_to_hbm [thread:$0]  %s253, 128, %s255, %s240
        $region44: #{tpu_custom_call.1} parent=31 // pred_fallthru
          _
      $region32: #{tpu_custom_call.1} parent=5 // pred_fallthru
        _
      %p258 = scmp.le.s32.totalorder 2, %s16
      // Predicated region
      $region45: #{tpu_custom_call.1} parent=5 // pred_check
        %p259 = pneg %p258
      $region46: #{tpu_custom_call.1} parent=5 // pred_check_branch
        %261 = sbr.rel (%p259) target = $region48
      $region47: #{tpu_custom_call.1} parent=5 // pred_region
        %s262 = ssub.s32 %s16, 2
        // Predicated region
        $region49: #{tpu_custom_call.1} parent=47 // pred_check
          %p263 = pneg %p113
        $region50: #{tpu_custom_call.1} parent=47 // pred_check_branch
          %265 = sbr.rel (%p263) target = $region52
        $region51: #{tpu_custom_call.1} parent=47 // pred_region
          %s266 = sand.u32 %s98, 1
          %s267 = scalar_lea.sflag [#allocation4], %s266
          %s268 = sand.u32 %s98, 1
          %s269 = smul.addr %s268, 8
          %s270 = scalar_lea.vmem [#allocation7], %s269
          %272 = dma.done %s267, 128
        $region52: #{tpu_custom_call.1} parent=47 // pred_fallthru
          _
      $region48: #{tpu_custom_call.1} parent=5 // pred_fallthru
        _
    $region6: #{tpu_custom_call.1} parent=1 // loop_footer
      %s20 = sadd.s32 1, %s16
    $region7: #{tpu_custom_call.1} parent=1 // loop_footer_branch
      %15 = sbr.rel target = $region3
    $region8: #{tpu_custom_call.1} parent=1 // loop_exit
      _
    %273 = vsyncpa [#allocation3], 1
    %s274 = scalar_lea.sflag [#allocation3], 1
    %275 = vsyncpa %s274, 1
    %276 = vsyncpa [#allocation6], 1
    %277 = vsyncpa [#allocation4], 1
    %s278 = scalar_lea.sflag [#allocation4], 1
    %279 = vsyncpa %s278, 1

</llo_original>
